<compile_context>
chip_gen: v5e
topology: v5e:2x2
jax: 0.10.0
libtpu: 0.0.40
codegen_flags: <defaults>
</compile_context>

<pallas_src>
import functools

import jax
import jax.numpy as jnp
from jax.experimental import pallas as pl
from jax.experimental.pallas import tpu as pltpu

LANE = 128
SUBLANE = 8
TM_TARGET = 1024  # rows per tile (1024x128 f32 = 512 KiB per input tile)


def _loss_kernel(fg1_ref, g2_ref, G1_ref, G2_ref, mse_ref, reg_ref,
                 acc_mse, acc_reg):
    """Per-core partial sums of (fg1-g2)^2 and (fg1-g2-G1+G2)^2."""
    i = pl.program_id(1)

    @pl.when(i == 0)
    def _():
        acc_mse[...] = jnp.zeros_like(acc_mse)
        acc_reg[...] = jnp.zeros_like(acc_reg)

    # Cast after load; accumulate in f32 regardless of input dtype.
    d = fg1_ref[...].astype(jnp.float32) - g2_ref[...].astype(jnp.float32)
    r = d - (G1_ref[...].astype(jnp.float32) - G2_ref[...].astype(jnp.float32))
    acc_mse[...] += d * d            # elementwise (VPU); no per-step XLU reduce
    acc_reg[...] += r * r

    @pl.when(i == pl.num_programs(1) - 1)
    def _():
        # Single full reduce per core, then scalar write to this core's slot.
        mse_ref[0, 0] = jnp.sum(acc_mse[...])
        reg_ref[0, 0] = jnp.sum(acc_reg[...])


def _tail_partial_sums(a, b, c, d):
    da = a.astype(jnp.float32) - b.astype(jnp.float32)
    ra = da - (c.astype(jnp.float32) - d.astype(jnp.float32))
    return jnp.sum(da * da), jnp.sum(ra * ra)


@functools.partial(jax.jit, static_argnames=("gamma",))
def regularized_loss(fg1, g2, G1f, G2f, gamma=2):
    n = fg1.size
    flats = [x.reshape(-1) for x in (fg1, g2, G1f, G2f)]  # no pad, no upcast

    full_rows = n // LANE
    tm = min(TM_TARGET, (full_rows // SUBLANE) * SUBLANE)

    if tm == 0:
        # Too small for a single (8,128) tile: pure jnp fallback.
        mse_sum, reg_sum = _tail_partial_sums(*flats)
    else:
        total_tiles = full_rows // tm
        ncores = 2 if total_tiles >= 2 else 1          # megacore split (v7x)
        tiles_per_core = total_tiles // ncores
        used_rows = ncores * tiles_per_core * tm
        used = used_rows * LANE

        slabs = [f[:used].reshape(used_rows, LANE) for f in flats]

        in_spec = pl.BlockSpec(
            (tm, LANE), lambda c, i, t=tiles_per_core: (c * t + i, 0))
        out_spec = pl.BlockSpec((1, 1), lambda c, i: (c, 0),
                                memory_space=pltpu.SMEM)

        mse_part, reg_part = pl.pallas_call(
            _loss_kernel,
            grid=(ncores, tiles_per_core),
            in_specs=[in_spec, in_spec, in_spec, in_spec],
            out_specs=(out_spec, out_spec),
            out_shape=(
                jax.ShapeDtypeStruct((ncores, 1), jnp.float32),
                jax.ShapeDtypeStruct((ncores, 1), jnp.float32),
            ),
            scratch_shapes=[
                pltpu.VMEM((tm, LANE), jnp.float32),
                pltpu.VMEM((tm, LANE), jnp.float32),
            ],
            compiler_params=pltpu.CompilerParams(
                dimension_semantics=("parallel", "arbitrary")),
        )(*slabs)

        mse_sum = jnp.sum(mse_part)
        reg_sum = jnp.sum(reg_part)

        if used < n:  # ragged tail (< one tile) folded in with plain jnp
            t_mse, t_reg = _tail_partial_sums(*(f[used:] for f in flats))
            mse_sum = mse_sum + t_mse
            reg_sum = reg_sum + t_reg

    inv_n = 1.0 / float(n)  # true element count, matches torch.mean
    return mse_sum * inv_n + gamma * (reg_sum * inv_n)


def regularized_loss_ref(fg1, g2, G1f, G2f, gamma=2):
    d = (fg1 - g2) ** 2
    r = (fg1 - g2 - G1f + G2f) ** 2
    return jnp.mean(d) + gamma * jnp.mean(r)


if __name__ == "__main__":
    key = jax.random.PRNGKey(0)
    k1, k2, k3, k4 = jax.random.split(key, 4)
    shape = (2, 4, 16, 16)  # NCHW, small synthetic shapes
    fg1 = jax.random.normal(k1, shape, dtype=jnp.float32)
    g2 = jax.random.normal(k2, shape, dtype=jnp.float32)
    G1f = jax.random.normal(k3, shape, dtype=jnp.float32)
    G2f = jax.random.normal(k4, shape, dtype=jnp.float32)

    out = regularized_loss(fg1, g2, G1f, G2f, gamma=2)
    out = jax.block_until_ready(out)

    ref = regularized_loss_ref(fg1, g2, G1f, G2f, gamma=2)
    assert jnp.allclose(out, ref, rtol=1e-5, atol=1e-5), (out, ref)
    print("KERNEL_OK")
</pallas_src>

<mosaic_0001>
module attributes {stable_mosaic.version = 11 : i64} {
  func.func @_loss_kernel(%arg0: i32, %arg1: i32, %arg2: memref<16x128xf32, #tpu.memory_space<vmem>>, %arg3: memref<16x128xf32, #tpu.memory_space<vmem>>, %arg4: memref<16x128xf32, #tpu.memory_space<vmem>>, %arg5: memref<16x128xf32, #tpu.memory_space<vmem>>, %arg6: memref<1x1xf32, #tpu.memory_space<smem>>, %arg7: memref<1x1xf32, #tpu.memory_space<smem>>, %arg8: memref<16x128xf32, #tpu.memory_space<vmem>>, %arg9: memref<16x128xf32, #tpu.memory_space<vmem>>) attributes {dimension_semantics = [#tpu.dimension_semantics<parallel>, #tpu.dimension_semantics<arbitrary>], iteration_bounds = array<i64: 1, 1>, scalar_prefetch = 0 : i64, scratch_operands = 2 : i64, tpu.core_type = #tpu.core_type<tc>, window_params = [{transform_indices = @transform_0, window_bounds = array<i64: 16, 128>}, {transform_indices = @transform_1, window_bounds = array<i64: 16, 128>}, {transform_indices = @transform_2, window_bounds = array<i64: 16, 128>}, {transform_indices = @transform_3, window_bounds = array<i64: 16, 128>}, {transform_indices = @transform_4, window_bounds = array<i64: 1, 1>}, {transform_indices = @transform_5, window_bounds = array<i64: 1, 1>}]} {
    %c0_i32 = arith.constant 0 : i32
    %0 = arith.cmpi eq, %arg1, %c0_i32 : i32
    %1 = arith.extui %0 : i1 to i32
    %c0_i32_0 = arith.constant 0 : i32
    %2 = arith.cmpi ne, %1, %c0_i32_0 : i32
    scf.if %2 {
      %cst = arith.constant 0.000000e+00 : f32
      %21 = vector.broadcast %cst : f32 to vector<16x128xf32>
      %c0_18 = arith.constant 0 : index
      %c0_19 = arith.constant 0 : index
      %22 = vector.load %arg8[%c0_18, %c0_19] : memref<16x128xf32, #tpu.memory_space<vmem>>, vector<16x128xf32>
      tpu.vector_store %arg8[%c0_18, %c0_19], %21 {strides = array<i32>} : memref<16x128xf32, #tpu.memory_space<vmem>>, vector<16x128xf32>,
      %cst_20 = arith.constant 0.000000e+00 : f32
      %23 = vector.broadcast %cst_20 : f32 to vector<16x128xf32>
      %c0_21 = arith.constant 0 : index
      %c0_22 = arith.constant 0 : index
      %24 = vector.load %arg9[%c0_21, %c0_22] : memref<16x128xf32, #tpu.memory_space<vmem>>, vector<16x128xf32>
      tpu.vector_store %arg9[%c0_21, %c0_22], %23 {strides = array<i32>} : memref<16x128xf32, #tpu.memory_space<vmem>>, vector<16x128xf32>,
    } else {
    }
    %c0 = arith.constant 0 : index
    %c0_1 = arith.constant 0 : index
    %3 = vector.load %arg2[%c0, %c0_1] : memref<16x128xf32, #tpu.memory_space<vmem>>, vector<16x128xf32>
    %c0_2 = arith.constant 0 : index
    %c0_3 = arith.constant 0 : index
    %4 = vector.load %arg3[%c0_2, %c0_3] : memref<16x128xf32, #tpu.memory_space<vmem>>, vector<16x128xf32>
    %5 = arith.subf %3, %4 : vector<16x128xf32>
    %c0_4 = arith.constant 0 : index
    %c0_5 = arith.constant 0 : index
    %6 = vector.load %arg4[%c0_4, %c0_5] : memref<16x128xf32, #tpu.memory_space<vmem>>, vector<16x128xf32>
    %c0_6 = arith.constant 0 : index
    %c0_7 = arith.constant 0 : index
    %7 = vector.load %arg5[%c0_6, %c0_7] : memref<16x128xf32, #tpu.memory_space<vmem>>, vector<16x128xf32>
    %8 = arith.subf %6, %7 : vector<16x128xf32>
    %9 = arith.subf %5, %8 : vector<16x128xf32>
    %c0_8 = arith.constant 0 : index
    %c0_9 = arith.constant 0 : index
    %10 = vector.load %arg8[%c0_8, %c0_9] : memref<16x128xf32, #tpu.memory_space<vmem>>, vector<16x128xf32>
    %11 = arith.mulf %5, %5 : vector<16x128xf32>
    %12 = arith.addf %10, %11 : vector<16x128xf32>
    %c0_10 = arith.constant 0 : index
    %c0_11 = arith.constant 0 : index
    %13 = vector.load %arg8[%c0_10, %c0_11] : memref<16x128xf32, #tpu.memory_space<vmem>>, vector<16x128xf32>
    tpu.vector_store %arg8[%c0_10, %c0_11], %12 {strides = array<i32>} : memref<16x128xf32, #tpu.memory_space<vmem>>, vector<16x128xf32>,
    %c0_12 = arith.constant 0 : index
    %c0_13 = arith.constant 0 : index
    %14 = vector.load %arg9[%c0_12, %c0_13] : memref<16x128xf32, #tpu.memory_space<vmem>>, vector<16x128xf32>
    %15 = arith.mulf %9, %9 : vector<16x128xf32>
    %16 = arith.addf %14, %15 : vector<16x128xf32>
    %c0_14 = arith.constant 0 : index
    %c0_15 = arith.constant 0 : index
    %17 = vector.load %arg9[%c0_14, %c0_15] : memref<16x128xf32, #tpu.memory_space<vmem>>, vector<16x128xf32>
    tpu.vector_store %arg9[%c0_14, %c0_15], %16 {strides = array<i32>} : memref<16x128xf32, #tpu.memory_space<vmem>>, vector<16x128xf32>,
    %c0_i32_16 = arith.constant 0 : i32
    %18 = arith.cmpi eq, %arg1, %c0_i32_16 : i32
    %19 = arith.extui %18 : i1 to i32
    %c0_i32_17 = arith.constant 0 : i32
    %20 = arith.cmpi ne, %19, %c0_i32_17 : i32
    scf.if %20 {
      %c0_18 = arith.constant 0 : index
      %c0_19 = arith.constant 0 : index
      %21 = vector.load %arg8[%c0_18, %c0_19] : memref<16x128xf32, #tpu.memory_space<vmem>>, vector<16x128xf32>
      %22 = vector.shape_cast %21 : vector<16x128xf32> to vector<1x16x128xf32>
      %cst = arith.constant dense<0.000000e+00> : vector<1xf32>
      %23 = vector.multi_reduction <add>, %22, %cst [1, 2] : vector<1x16x128xf32> to vector<1xf32>
      %24 = vector.shape_cast %23 : vector<1xf32> to vector<1x1x1xf32>
      %25 = vector.extract %24[0, 0, 0] : f32 from vector<1x1x1xf32>
      %c0_20 = arith.constant 0 : index
      %c0_21 = arith.constant 0 : index
      %26 = memref.load %arg6[%c0_20, %c0_21] : memref<1x1xf32, #tpu.memory_space<smem>>
      memref.store %25, %arg6[%c0_20, %c0_21] : memref<1x1xf32, #tpu.memory_space<smem>>
      %c0_22 = arith.constant 0 : index
      %c0_23 = arith.constant 0 : index
      %27 = vector.load %arg9[%c0_22, %c0_23] : memref<16x128xf32, #tpu.memory_space<vmem>>, vector<16x128xf32>
      %28 = vector.shape_cast %27 : vector<16x128xf32> to vector<1x16x128xf32>
      %cst_24 = arith.constant dense<0.000000e+00> : vector<1xf32>
      %29 = vector.multi_reduction <add>, %28, %cst_24 [1, 2] : vector<1x16x128xf32> to vector<1xf32>
      %30 = vector.shape_cast %29 : vector<1xf32> to vector<1x1x1xf32>
      %31 = vector.extract %30[0, 0, 0] : f32 from vector<1x1x1xf32>
      %c0_25 = arith.constant 0 : index
      %c0_26 = arith.constant 0 : index
      %32 = memref.load %arg7[%c0_25, %c0_26] : memref<1x1xf32, #tpu.memory_space<smem>>
      memref.store %31, %arg7[%c0_25, %c0_26] : memref<1x1xf32, #tpu.memory_space<smem>>
    } else {
    }
    return
  }
  func.func @transform_0(%arg0: i32, %arg1: i32) -> (i32, i32) {
    %c1_i32 = arith.constant 1 : i32
    %0 = arith.muli %arg0, %c1_i32 : i32
    %1 = arith.addi %0, %arg1 : i32
    %c0_i32 = arith.constant 0 : i32
    %c0_i32_0 = arith.constant 0 : i32
    return %1, %c0_i32 : i32, i32
  }
  func.func @transform_1(%arg0: i32, %arg1: i32) -> (i32, i32) {
    %c1_i32 = arith.constant 1 : i32
    %0 = arith.muli %arg0, %c1_i32 : i32
    %1 = arith.addi %0, %arg1 : i32
    %c0_i32 = arith.constant 0 : i32
    %c0_i32_0 = arith.constant 0 : i32
    return %1, %c0_i32 : i32, i32
  }
  func.func @transform_2(%arg0: i32, %arg1: i32) -> (i32, i32) {
    %c1_i32 = arith.constant 1 : i32
    %0 = arith.muli %arg0, %c1_i32 : i32
    %1 = arith.addi %0, %arg1 : i32
    %c0_i32 = arith.constant 0 : i32
    %c0_i32_0 = arith.constant 0 : i32
    return %1, %c0_i32 : i32, i32
  }
  func.func @transform_3(%arg0: i32, %arg1: i32) -> (i32, i32) {
    %c1_i32 = arith.constant 1 : i32
    %0 = arith.muli %arg0, %c1_i32 : i32
    %1 = arith.addi %0, %arg1 : i32
    %c0_i32 = arith.constant 0 : i32
    %c0_i32_0 = arith.constant 0 : i32
    return %1, %c0_i32 : i32, i32
  }
  func.func @transform_4(%arg0: i32, %arg1: i32) -> (i32, i32) {
    %c0_i32 = arith.constant 0 : i32
    %c0_i32_0 = arith.constant 0 : i32
    return %arg0, %c0_i32 : i32, i32
  }
  func.func @transform_5(%arg0: i32, %arg1: i32) -> (i32, i32) {
    %c0_i32 = arith.constant 0 : i32
    %c0_i32_0 = arith.constant 0 : i32
    return %arg0, %c0_i32 : i32, i32
  }
}

</mosaic_0001>

<llo_original>
// kernel: regularized_loss.1
$region0: #{regularized_loss.1}
  #allocation0 [shape = 'u32[]', space=smem, size = 0x4, offset = 0x4, fixed_abs, tag = 'smem constant byte address 0x4 - core index']
  #allocation1 [shape = 'u32[72,128]{1,0:T(1,128)}', space=vmem, size = 0x9000, scoped, tag = 'internal scratch']
  #allocation2 [shape = 'f32[16,128]{1,0:T(8,128)}', space=vmem, size = 0x2000, scoped, tag = 'scratch operand']
  #allocation3 [shape = 'f32[16,128]{1,0:T(8,128)}', space=vmem, size = 0x2000, scoped, tag = 'scratch operand']
  %s0 = inlined_call_operand.vmem [shape: f32[16,128], index: 0, kind: input, shape index: {}]
  %s1 = inlined_call_operand.vmem [shape: f32[16,128], index: 1, kind: input, shape index: {}]
  %s2 = inlined_call_operand.vmem [shape: f32[16,128], index: 2, kind: input, shape index: {}]
  %s3 = inlined_call_operand.vmem [shape: f32[16,128], index: 3, kind: input, shape index: {}]
  %s4 = inlined_call_operand.hbm [shape: f32[1,1], index: 4, kind: output, shape index: {0}]
  %s5 = inlined_call_operand.hbm [shape: f32[1,1], index: 5, kind: output, shape index: {1}]
  %6 = xla_tuple %s4, %s5
  %s7 = sld [smem:[#allocation0]]
  $region42: #{regularized_loss.1} parent=0
    _
  %s9 = ssub.s32 1, %s7
  %s10 = scalar_select 0, %s9, %s7
  $region1: #{regularized_loss.1} parent=0
    #allocation4 [shape = 'u8[512]{0}', space=smem, size = 0x200, scoped, tag = 'output window, operand 0, single buffered']
    #allocation5 [shape = 's32[1]{0}', space=sflag, size = 0x4, scoped, tag = 'scoped memory for regularized_loss.1']
    #allocation6 [shape = 'u8[512]{0}', space=smem, size = 0x200, scoped, tag = 'output window, operand 1, single buffered']
    #allocation7 [shape = 's32[1]{0}', space=sflag, size = 0x4, scoped, tag = 'scoped memory for regularized_loss.1']
    %11 = vsyncpa [#allocation5], 0
    %12 = vsyncpa [#allocation7], 0
    // Predicated region
    $region2: #{regularized_loss.1} parent=1 // pred_check
      _
    $region3: #{regularized_loss.1} parent=1 // pred_check_branch
      %14 = sbr.rel (0) target = $region5
    $region4: #{regularized_loss.1} parent=1 // pred_region
      %s15 = sadd.s32 0, 0
      %s16 = smul.u32 2, %s15
      %p17 = scmp.lt.s32.totalorder %s16, 1
      %s18 = scalar_select %p17, %s16, 1
      %s19 = smul.addr %s18, 8
      %s20 = scalar_lea.vmem %s0, %s19
      %s21 = sadd.s32 0, 0
      %s22 = smul.u32 2, %s21
    $region5: #{regularized_loss.1} parent=1 // pred_fallthru
      _
    // Predicated region
    $region6: #{regularized_loss.1} parent=1 // pred_check
      _
    $region7: #{regularized_loss.1} parent=1 // pred_check_branch
      %24 = sbr.rel (0) target = $region9
    $region8: #{regularized_loss.1} parent=1 // pred_region
      %s25 = sadd.s32 0, 0
      %s26 = smul.u32 2, %s25
      %p27 = scmp.lt.s32.totalorder %s26, 1
      %s28 = scalar_select %p27, %s26, 1
      %s29 = smul.addr %s28, 8
      %s30 = scalar_lea.vmem %s1, %s29
      %s31 = sadd.s32 0, 0
      %s32 = smul.u32 2, %s31
    $region9: #{regularized_loss.1} parent=1 // pred_fallthru
      _
    // Predicated region
    $region10: #{regularized_loss.1} parent=1 // pred_check
      _
    $region11: #{regularized_loss.1} parent=1 // pred_check_branch
      %34 = sbr.rel (0) target = $region13
    $region12: #{regularized_loss.1} parent=1 // pred_region
      %s35 = sadd.s32 0, 0
      %s36 = smul.u32 2, %s35
      %p37 = scmp.lt.s32.totalorder %s36, 1
      %s38 = scalar_select %p37, %s36, 1
      %s39 = smul.addr %s38, 8
      %s40 = scalar_lea.vmem %s2, %s39
      %s41 = sadd.s32 0, 0
      %s42 = smul.u32 2, %s41
    $region13: #{regularized_loss.1} parent=1 // pred_fallthru
      _
    // Predicated region
    $region14: #{regularized_loss.1} parent=1 // pred_check
      _
    $region15: #{regularized_loss.1} parent=1 // pred_check_branch
      %44 = sbr.rel (0) target = $region17
    $region16: #{regularized_loss.1} parent=1 // pred_region
      %s45 = sadd.s32 0, 0
      %s46 = smul.u32 2, %s45
      %p47 = scmp.lt.s32.totalorder %s46, 1
      %s48 = scalar_select %p47, %s46, 1
      %s49 = smul.addr %s48, 8
      %s50 = scalar_lea.vmem %s3, %s49
      %s51 = sadd.s32 0, 0
      %s52 = smul.u32 2, %s51
    $region17: #{regularized_loss.1} parent=1 // pred_fallthru
      _
    %s53 = sadd.s32 0, 0
    %s54 = smul.u32 2, %s53
    %p55 = scmp.lt.s32.totalorder %s54, 1
    %s56 = scalar_select %p55, %s54, 1
    %s57 = smul.addr %s56, 8
    %s58 = scalar_lea.vmem %s0, %s57
    %s59 = sadd.s32 0, 0
    %s60 = smul.u32 2, %s59
    %p61 = scmp.lt.s32.totalorder %s60, 1
    %s62 = scalar_select %p61, %s60, 1
    %s63 = smul.addr %s62, 8
    %s64 = scalar_lea.vmem %s1, %s63
    %s65 = sadd.s32 0, 0
    %s66 = smul.u32 2, %s65
    %p67 = scmp.lt.s32.totalorder %s66, 1
    %s68 = scalar_select %p67, %s66, 1
    %s69 = smul.addr %s68, 8
    %s70 = scalar_lea.vmem %s2, %s69
    %s71 = sadd.s32 0, 0
    %s72 = smul.u32 2, %s71
    %p73 = scmp.lt.s32.totalorder %s72, 1
    %s74 = scalar_select %p73, %s72, 1
    %s75 = smul.addr %s74, 8
    %s76 = scalar_lea.vmem %s3, %s75
    %s77 = sadd.s32 0, 0
    %s78 = smul.u32 2, %s77
    %p79 = scmp.lt.s32.totalorder %s78, 1
    %s80 = scalar_select %p79, %s78, 1
    %s81 = smul.addr %s80, 8
    %s82 = scalar_lea.vmem %s0, %s81
    %s83 = sadd.s32 0, 0
    %s84 = smul.u32 2, %s83
    %s85 = sadd.s32 0, 0
    %s86 = smul.u32 2, %s85
    %p87 = scmp.lt.s32.totalorder %s86, 1
    %s88 = scalar_select %p87, %s86, 1
    %s89 = smul.addr %s88, 8
    %s90 = scalar_lea.vmem %s1, %s89
    %s91 = sadd.s32 0, 0
    %s92 = smul.u32 2, %s91
    %s93 = sadd.s32 0, 0
    %s94 = smul.u32 2, %s93
    %p95 = scmp.lt.s32.totalorder %s94, 1
    %s96 = scalar_select %p95, %s94, 1
    %s97 = smul.addr %s96, 8
    %s98 = scalar_lea.vmem %s2, %s97
    %s99 = sadd.s32 0, 0
    %s100 = smul.u32 2, %s99
    %s101 = sadd.s32 0, 0
    %s102 = smul.u32 2, %s101
    %p103 = scmp.lt.s32.totalorder %s102, 1
    %s104 = scalar_select %p103, %s102, 1
    %s105 = smul.addr %s104, 8
    %s106 = scalar_lea.vmem %s3, %s105
    %s107 = sadd.s32 0, 0
    %s108 = smul.u32 2, %s107
    %p109 = scmp.eq.s32.totalorder 0, 0
    // Predicated region
    $region18: #{regularized_loss.1} parent=1 // pred_check
      %p110 = pneg %p109
    $region19: #{regularized_loss.1} parent=1 // pred_check_branch
      %112 = sbr.rel (%p110) target = $region21
    $region20: #{regularized_loss.1} parent=1 // pred_region
      %113 = vst [vmem:[#allocation2] sm:$0xff] 0.0
      %114 = vst [vmem:[#allocation2 + $0x8] sm:$0xff] 0.0
      %115 = vst [vmem:[#allocation3] sm:$0xff] 0.0
      %116 = vst [vmem:[#allocation3 + $0x8] sm:$0xff] 0.0
    $region21: #{regularized_loss.1} parent=1 // pred_fallthru
      _
    %v117 = vld [vmem:[%s82] sm:$0xff]
    %v118 = vld [vmem:[%s82 + $0x8] sm:$0xff]
    %v119 = vld [vmem:[%s90] sm:$0xff]
    %v120 = vld [vmem:[%s90 + $0x8] sm:$0xff]
    %v121 = vsub.f32 %v117, %v119
    %v122 = vsub.f32 %v118, %v120
    %v123 = vld [vmem:[%s98] sm:$0xff]
    %v124 = vld [vmem:[%s98 + $0x8] sm:$0xff]
    %v125 = vld [vmem:[%s106] sm:$0xff]
    %v126 = vld [vmem:[%s106 + $0x8] sm:$0xff]
    %v127 = vsub.f32 %v123, %v125
    %v128 = vsub.f32 %v124, %v126
    %v129 = vsub.f32 %v121, %v127
    %v130 = vsub.f32 %v122, %v128
    %v131 = vld [vmem:[#allocation2] sm:$0xff]
    %v132 = vld [vmem:[#allocation2 + $0x8] sm:$0xff]
    %v133 = vmul.f32 %v121, %v121
    %v134 = vmul.f32 %v122, %v122
    %v135 = vadd.f32 %v131, %v133
    %v136 = vadd.f32 %v132, %v134
    %137 = vst [vmem:[#allocation2] sm:$0xff] %v135
    %138 = vst [vmem:[#allocation2 + $0x8] sm:$0xff] %v136
    %v139 = vld [vmem:[#allocation3] sm:$0xff]
    %v140 = vld [vmem:[#allocation3 + $0x8] sm:$0xff]
    %v141 = vmul.f32 %v129, %v129
    %v142 = vmul.f32 %v130, %v130
    %v143 = vadd.f32 %v139, %v141
    %v144 = vadd.f32 %v140, %v142
    %145 = vst [vmem:[#allocation3] sm:$0xff] %v143
    %146 = vst [vmem:[#allocation3 + $0x8] sm:$0xff] %v144
    // Predicated region
    $region22: #{regularized_loss.1} parent=1 // pred_check
      %p147 = pneg %p109
    $region23: #{regularized_loss.1} parent=1 // pred_check_branch
      %149 = sbr.rel (%p147) target = $region25
    $region24: #{regularized_loss.1} parent=1 // pred_region
      %v150 = vld [vmem:[#allocation2] sm:$0xff]
      %v151 = vld [vmem:[#allocation2 + $0x8] sm:$0xff]
      %v152 = vadd.f32 %v150, %v151
      %153 = vadd.xlane.f32.xlu0 %v152
      %v154 = vpop.xlane.xlu0 %153
      %v155 = vrot.slane %v154, 4
      %v156 = vadd.f32 %v154, %v155
      %v157 = vrot.slane %v156, 2
      %v158 = vadd.f32 %v156, %v157
      %v159 = vrot.slane %v158, 1
      %v160 = vadd.f32 %v158, %v159
      %s161 = vtos %v160
      %s162 = scalar_lea.smem [#allocation4], 0
      %163 = sst [smem:[%s162]] %s161
      %v164 = vld [vmem:[#allocation3] sm:$0xff]
      %v165 = vld [vmem:[#allocation3 + $0x8] sm:$0xff]
      %v166 = vadd.f32 %v164, %v165
      %167 = vadd.xlane.f32.xlu0 %v166
      %v168 = vpop.xlane.xlu0 %167
      %v169 = vrot.slane %v168, 4
      %v170 = vadd.f32 %v168, %v169
      %v171 = vrot.slane %v170, 2
      %v172 = vadd.f32 %v170, %v171
      %v173 = vrot.slane %v172, 1
      %v174 = vadd.f32 %v172, %v173
      %s175 = vtos %v174
      %s176 = scalar_lea.smem [#allocation6], 0
      %177 = sst [smem:[%s176]] %s175
    $region25: #{regularized_loss.1} parent=1 // pred_fallthru
      _
    // Predicated region
    $region26: #{regularized_loss.1} parent=1 // pred_check
      _
    $region27: #{regularized_loss.1} parent=1 // pred_check_branch
      %179 = sbr.rel (0) target = $region29
    $region28: #{regularized_loss.1} parent=1 // pred_region
      %181 = vsyncadd [#allocation5], 0
      %s183 = sshll.u32 %s4, 4
      %s184 = int_to_ptr.hbm [resolvable:$true] %s183
      %186 = dma.smem_to_hbm [#allocation4], 16, %s184, [#allocation5]
    $region29: #{regularized_loss.1} parent=1 // pred_fallthru
      _
    // Predicated region
    $region30: #{regularized_loss.1} parent=1 // pred_check
      _
    $region31: #{regularized_loss.1} parent=1 // pred_check_branch
      %188 = sbr.rel (0) target = $region33
    $region32: #{regularized_loss.1} parent=1 // pred_region
      %190 = vsyncadd [#allocation7], 0
      %s192 = sshll.u32 %s5, 4
      %s193 = int_to_ptr.hbm [resolvable:$true] %s192
      %195 = dma.smem_to_hbm [#allocation6], 16, %s193, [#allocation7]
    $region33: #{regularized_loss.1} parent=1 // pred_fallthru
      _
    // Predicated region
    $region34: #{regularized_loss.1} parent=1 // pred_check
      _
    $region35: #{regularized_loss.1} parent=1 // pred_check_branch
      %197 = sbr.rel (0) target = $region37
    $region36: #{regularized_loss.1} parent=1 // pred_region
      %199 = dma.done [#allocation5], 16
    $region37: #{regularized_loss.1} parent=1 // pred_fallthru
      _
    // Predicated region
    $region38: #{regularized_loss.1} parent=1 // pred_check
      _
    $region39: #{regularized_loss.1} parent=1 // pred_check_branch
      %201 = sbr.rel (0) target = $region41
    $region40: #{regularized_loss.1} parent=1 // pred_region
      %203 = dma.done [#allocation7], 16
    $region41: #{regularized_loss.1} parent=1 // pred_fallthru
      _
    %204 = sfence
    %205 = vsyncpa [#allocation5], 1
    %206 = vsyncpa [#allocation7], 1

</llo_original>
